<compile_context>
chip_gen: v7x
topology: tpu7x:2x2x1
jax: 0.10.0
libtpu: 0.0.40
codegen_flags: <defaults>
</compile_context>

<pallas_src>
import functools

import jax
import jax.numpy as jnp
from jax import lax
from jax.experimental import pallas as pl
from jax.experimental.pallas import tpu as pltpu


def _round_up(x, m):
    return (x + m - 1) // m * m


def _ce_online_kernel(pos_ref, logit_ref, nll_ref, m_ref, l_ref, *,
                      tile_i, num_items):
    """Online (flash-style) LSE over I-tiles; NLL = LSE - target_logit."""
    k = pl.program_id(1)                       # I-tile index (reduction axis)

    @pl.when(k == 0)
    def _init():
        m_ref[...] = jnp.full_like(m_ref, -jnp.inf)
        l_ref[...] = jnp.zeros_like(l_ref)

    # Stream logits in their native dtype; LSE math in f32 (vreg-only cost).
    logits = logit_ref[...].astype(jnp.float32)            # (tile_n, tile_i)

    if num_items % tile_i != 0:
        # Ragged last I-tile: out-of-range item columns hold unspecified data,
        # mask them to -inf so they contribute nothing to max / exp-sum. This
        # path is not emitted at all for tile-aligned item counts.
        rem = num_items - k * tile_i                        # scalar, >=1
        col = lax.broadcasted_iota(jnp.int32, logits.shape, 1)
        logits = jnp.where(col < rem, logits, -jnp.inf)

    # Online max / exp-sum update.
    m_prev = m_ref[...]
    m_new = jnp.maximum(m_prev, jnp.max(logits, axis=-1, keepdims=True))
    l_ref[...] = (jnp.exp(m_prev - m_new) * l_ref[...]
                  + jnp.sum(jnp.exp(logits - m_new), axis=-1, keepdims=True))
    m_ref[...] = m_new

    @pl.when(k == pl.num_programs(1) - 1)
    def _finalize():
        nll = m_ref[...] + jnp.log(l_ref[...]) - pos_ref[...]
        nll_ref[...] = nll.astype(nll_ref.dtype)


def sequence_recommender_loss(target, logit, *, reduction="elementwise_mean",
                              tile_n=512, tile_i=None):
    """Cross-entropy SequenceRecommenderLoss forward.

    target: (N,) int   — positive target item index per position
    logit : (N, I) flt — item logits per position
    """
    # TODO(synk): the abstract base also allows (N, BS) sampled targets and an
    # ignore_index mask for padded positions; only the dense (N,) CE variant is
    # implemented here.
    N, I = logit.shape
    itemsize = jnp.dtype(logit.dtype).itemsize

    # Tile selection: wide I-tiles amortise the ~0.35us per-grid-step overhead;
    # N-tiles sized so at least two exist (megacore sharding on v7x).
    if tile_i is None:
        tile_i = 8192 if itemsize <= 2 else 4096
    sub_align = 16 if itemsize <= 2 else 8
    tile_n = max(sub_align,
                 min(_round_up(tile_n, sub_align),
                     _round_up(pl.cdiv(N, 2), sub_align)))
    tile_i = min(_round_up(tile_i, 128), _round_up(I, 128))

    # O(N) gather of the target logit in the wrapper; the kernel hot loop stays
    # pure streaming max/exp/sum.
    tgt2 = target.reshape(-1, 1).astype(jnp.int32)           # (N, 1)
    pos = jnp.take_along_axis(logit, tgt2, axis=-1).astype(jnp.float32)

    # VMEM budget from the actual footprint (double-buffered logits stream plus
    # tiny per-row buffers) plus headroom for Mosaic internal scratch.
    vmem_bytes = (2 * tile_n * tile_i * itemsize   # double-buffered logits tile
                  + 6 * tile_n * 4                 # pos/out/(m,l) per-row bufs
                  + (8 << 20))                     # Mosaic internal headroom
    vmem_bytes = int(min(max(vmem_bytes, 16 << 20), 48 << 20))

    kernel = functools.partial(_ce_online_kernel, tile_i=tile_i, num_items=I)

    nll = pl.pallas_call(
        kernel,
        out_shape=jax.ShapeDtypeStruct((N, 1), jnp.float32),
        grid_spec=pltpu.PrefetchScalarGridSpec(
            num_scalar_prefetch=0,
            grid=(pl.cdiv(N, tile_n), pl.cdiv(I, tile_i)),
            in_specs=[
                # target logit per row: tiny, constant across the I axis
                pl.BlockSpec((tile_n, 1), lambda i, k: (i, 0)),
                # logits: (tile_n, tile_i) streaming tile in native dtype
                pl.BlockSpec((tile_n, tile_i), lambda i, k: (i, k)),
            ],
            # per-row NLL; same block across the I (reduction) axis
            out_specs=pl.BlockSpec((tile_n, 1), lambda i, k: (i, 0)),
            scratch_shapes=[pltpu.VMEM((tile_n, 1), jnp.float32)] * 2,
        ),
        compiler_params=pltpu.CompilerParams(
            dimension_semantics=("parallel", "arbitrary"),
            vmem_limit_bytes=vmem_bytes,
        ),
    )(pos, logit)

    nll_rows = nll[:, 0]
    if reduction in ("elementwise_mean", "mean"):
        return jnp.sum(nll_rows) / jnp.float32(N)
    elif reduction == "sum":
        return jnp.sum(nll_rows)
    elif reduction == "none":
        return nll_rows
    else:
        raise ValueError(f"unknown reduction {reduction}")


def _reference_loss(target, logit):
    logp = jax.nn.log_softmax(logit.astype(jnp.float32), axis=-1)
    nll = -jnp.take_along_axis(
        logp, target.reshape(-1, 1).astype(jnp.int32), axis=-1)[:, 0]
    return jnp.mean(nll)


if __name__ == "__main__":
    # Small shapes: N = 60 positions (ragged vs the N-tile), I = 1000 items
    # (non-multiple of 128/tile_i to exercise the in-kernel column mask).
    N, I = 60, 1000
    key = jax.random.PRNGKey(0)
    k_logit, k_tgt = jax.random.split(key)
    logits_f32 = jax.random.normal(k_logit, (N, I), dtype=jnp.float32)
    targets = jax.random.randint(k_tgt, (N,), 0, I, dtype=jnp.int32)

    # f32 path
    loss = jax.block_until_ready(sequence_recommender_loss(targets, logits_f32))
    ref = jax.block_until_ready(_reference_loss(targets, logits_f32))
    assert jnp.allclose(loss, ref, rtol=1e-5, atol=1e-5), (loss, ref)

    # bf16 streaming path (compute/accumulate in f32 inside the kernel)
    logits_bf16 = logits_f32.astype(jnp.bfloat16)
    loss_bf16 = jax.block_until_ready(
        sequence_recommender_loss(targets, logits_bf16))
    ref_bf16 = jax.block_until_ready(_reference_loss(targets, logits_bf16))
    assert jnp.allclose(loss_bf16, ref_bf16, rtol=1e-3, atol=1e-3), (
        loss_bf16, ref_bf16)

    print("KERNEL_OK")
</pallas_src>

<mosaic_0001>
module attributes {stable_mosaic.version = 11 : i64} {
  func.func @_ce_online_kernel(%arg0: i32, %arg1: i32, %arg2: memref<32x1xf32, #tpu.memory_space<vmem>>, %arg3: memref<32x1024xf32, #tpu.memory_space<vmem>>, %arg4: memref<32x1xf32, #tpu.memory_space<vmem>>, %arg5: memref<32x1xf32, #tpu.memory_space<vmem>>, %arg6: memref<32x1xf32, #tpu.memory_space<vmem>>) attributes {dimension_semantics = [#tpu.dimension_semantics<parallel>, #tpu.dimension_semantics<arbitrary>], iteration_bounds = array<i64: 2, 1>, scalar_prefetch = 0 : i64, scratch_operands = 2 : i64, tpu.core_type = #tpu.core_type<tc>, window_params = [{transform_indices = @transform_0, window_bounds = array<i64: 32, 1>}, {transform_indices = @transform_1, window_bounds = array<i64: 32, 1024>}, {transform_indices = @transform_2, window_bounds = array<i64: 32, 1>}]} {
    %c0_i32 = arith.constant 0 : i32
    %0 = arith.cmpi eq, %arg1, %c0_i32 : i32
    %1 = arith.extui %0 : i1 to i32
    %c0_i32_0 = arith.constant 0 : i32
    %2 = arith.cmpi ne, %1, %c0_i32_0 : i32
    scf.if %2 {
      %cst_14 = arith.constant 0xFF800000 : f32
      %30 = vector.broadcast %cst_14 : f32 to vector<32x1xf32>
      %c0_15 = arith.constant 0 : index
      %c0_16 = arith.constant 0 : index
      %31 = vector.load %arg5[%c0_15, %c0_16] : memref<32x1xf32, #tpu.memory_space<vmem>>, vector<32x1xf32>
      tpu.vector_store %arg5[%c0_15, %c0_16], %30 {strides = array<i32>} : memref<32x1xf32, #tpu.memory_space<vmem>>, vector<32x1xf32>,
      %cst_17 = arith.constant 0.000000e+00 : f32
      %32 = vector.broadcast %cst_17 : f32 to vector<32x1xf32>
      %c0_18 = arith.constant 0 : index
      %c0_19 = arith.constant 0 : index
      %33 = vector.load %arg6[%c0_18, %c0_19] : memref<32x1xf32, #tpu.memory_space<vmem>>, vector<32x1xf32>
      tpu.vector_store %arg6[%c0_18, %c0_19], %32 {strides = array<i32>} : memref<32x1xf32, #tpu.memory_space<vmem>>, vector<32x1xf32>,
    } else {
    }
    %c0 = arith.constant 0 : index
    %c0_1 = arith.constant 0 : index
    %3 = vector.load %arg3[%c0, %c0_1] : memref<32x1024xf32, #tpu.memory_space<vmem>>, vector<32x1024xf32>
    %c1024_i32 = arith.constant 1024 : i32
    %4 = arith.muli %arg1, %c1024_i32 : i32
    %c1000_i32 = arith.constant 1000 : i32
    %5 = arith.subi %c1000_i32, %4 : i32
    %6 = tpu.iota {dimensions = array<i32: 1>} : vector<32x1024xi32>
    %7 = vector.broadcast %5 : i32 to vector<32x1024xi32>
    %8 = arith.cmpi slt, %6, %7 : vector<32x1024xi32>
    %cst = arith.constant 0xFF800000 : f32
    %9 = vector.broadcast %cst : f32 to vector<32x1024xf32>
    %10 = arith.select %8, %3, %9 : vector<32x1024xi1>, vector<32x1024xf32>
    %c0_2 = arith.constant 0 : index
    %c0_3 = arith.constant 0 : index
    %11 = vector.load %arg5[%c0_2, %c0_3] : memref<32x1xf32, #tpu.memory_space<vmem>>, vector<32x1xf32>
    %cst_4 = arith.constant dense<0xFF800000> : vector<32xf32>
    %12 = vector.multi_reduction <maximumf>, %10, %cst_4 [1] : vector<32x1024xf32> to vector<32xf32>
    %13 = vector.shape_cast %12 : vector<32xf32> to vector<32x1xf32>
    %14 = arith.maximumf %11, %13 : vector<32x1xf32>
    %15 = arith.subf %11, %14 : vector<32x1xf32>
    %16 = math.exp %15 : vector<32x1xf32>
    %c0_5 = arith.constant 0 : index
    %c0_6 = arith.constant 0 : index
    %17 = vector.load %arg6[%c0_5, %c0_6] : memref<32x1xf32, #tpu.memory_space<vmem>>, vector<32x1xf32>
    %18 = arith.mulf %16, %17 : vector<32x1xf32>
    %19 = vector.broadcast %14 : vector<32x1xf32> to vector<32x1024xf32>
    %20 = arith.subf %10, %19 : vector<32x1024xf32>
    %21 = math.exp %20 : vector<32x1024xf32>
    %cst_7 = arith.constant dense<0.000000e+00> : vector<32xf32>
    %22 = vector.multi_reduction <add>, %21, %cst_7 [1] : vector<32x1024xf32> to vector<32xf32>
    %23 = vector.shape_cast %22 : vector<32xf32> to vector<32x1xf32>
    %24 = arith.addf %18, %23 : vector<32x1xf32>
    %c0_8 = arith.constant 0 : index
    %c0_9 = arith.constant 0 : index
    %25 = vector.load %arg6[%c0_8, %c0_9] : memref<32x1xf32, #tpu.memory_space<vmem>>, vector<32x1xf32>
    tpu.vector_store %arg6[%c0_8, %c0_9], %24 {strides = array<i32>} : memref<32x1xf32, #tpu.memory_space<vmem>>, vector<32x1xf32>,
    %c0_10 = arith.constant 0 : index
    %c0_11 = arith.constant 0 : index
    %26 = vector.load %arg5[%c0_10, %c0_11] : memref<32x1xf32, #tpu.memory_space<vmem>>, vector<32x1xf32>
    tpu.vector_store %arg5[%c0_10, %c0_11], %14 {strides = array<i32>} : memref<32x1xf32, #tpu.memory_space<vmem>>, vector<32x1xf32>,
    %c0_i32_12 = arith.constant 0 : i32
    %27 = arith.cmpi eq, %arg1, %c0_i32_12 : i32
    %28 = arith.extui %27 : i1 to i32
    %c0_i32_13 = arith.constant 0 : i32
    %29 = arith.cmpi ne, %28, %c0_i32_13 : i32
    scf.if %29 {
      %c0_14 = arith.constant 0 : index
      %c0_15 = arith.constant 0 : index
      %30 = vector.load %arg5[%c0_14, %c0_15] : memref<32x1xf32, #tpu.memory_space<vmem>>, vector<32x1xf32>
      %c0_16 = arith.constant 0 : index
      %c0_17 = arith.constant 0 : index
      %31 = vector.load %arg6[%c0_16, %c0_17] : memref<32x1xf32, #tpu.memory_space<vmem>>, vector<32x1xf32>
      %32 = math.log %31 : vector<32x1xf32>
      %33 = arith.addf %30, %32 : vector<32x1xf32>
      %c0_18 = arith.constant 0 : index
      %c0_19 = arith.constant 0 : index
      %34 = vector.load %arg2[%c0_18, %c0_19] : memref<32x1xf32, #tpu.memory_space<vmem>>, vector<32x1xf32>
      %35 = arith.subf %33, %34 : vector<32x1xf32>
      %c0_20 = arith.constant 0 : index
      %c0_21 = arith.constant 0 : index
      %36 = vector.load %arg4[%c0_20, %c0_21] : memref<32x1xf32, #tpu.memory_space<vmem>>, vector<32x1xf32>
      tpu.vector_store %arg4[%c0_20, %c0_21], %35 {strides = array<i32>} : memref<32x1xf32, #tpu.memory_space<vmem>>, vector<32x1xf32>,
    } else {
    }
    return
  }
  func.func @transform_0(%arg0: i32, %arg1: i32) -> (i32, i32) {
    %c0_i32 = arith.constant 0 : i32
    %c0_i32_0 = arith.constant 0 : i32
    return %arg0, %c0_i32 : i32, i32
  }
  func.func @transform_1(%arg0: i32, %arg1: i32) -> (i32, i32) {
    %c0_i32 = arith.constant 0 : i32
    return %arg0, %arg1 : i32, i32
  }
  func.func @transform_2(%arg0: i32, %arg1: i32) -> (i32, i32) {
    %c0_i32 = arith.constant 0 : i32
    %c0_i32_0 = arith.constant 0 : i32
    return %arg0, %c0_i32 : i32, i32
  }
}

</mosaic_0001>

<llo_original>
// kernel: tpu_custom_call.1
$region0: #{tpu_custom_call.1}
  #allocation0 [shape = 'u32[]', space=smem, size = 0x4, offset = 0x4, fixed_abs, tag = 'smem constant byte address 0x4 - core index']
  #allocation1 [shape = 'u32[144,128]{1,0:T(1,128)}', space=vmem, size = 0x12000, scoped, tag = 'internal scratch']
  #allocation2 [shape = 'f32[32,1]{1,0:T(8,128)}', space=vmem, size = 0x4000, scoped, tag = 'scratch operand']
  #allocation3 [shape = 'f32[32,1]{1,0:T(8,128)}', space=vmem, size = 0x4000, scoped, tag = 'scratch operand']
  %s0 = inlined_call_operand.vmem [shape: f32[60,1], index: 0, kind: input, shape index: {}]
  %s1 = inlined_call_operand.hbm [shape: f32[60,1000], index: 1, kind: input, shape index: {}]
  %s2 = inlined_call_operand.vmem [shape: f32[60,1], index: 2, kind: output, shape index: {}]
  %s3 = sld [smem:[#allocation0]]
  $region53: #{tpu_custom_call.1} parent=0
    _
  %s5 = ssub.s32 1, %s3
  %s6 = scalar_select 0, %s5, %s3
  $region1: #{tpu_custom_call.1} parent=0
    #allocation4 [shape = 'u8[262144]{0}', space=vmem, size = 0x40000, scoped, tag = 'input window, operand 1']
    #allocation5 [shape = 's32[2]{0}', space=sflag, size = 0x8, scoped, tag = 'scoped memory for tpu_custom_call.1']
    %7 = vsyncpa [#allocation5], 0
    %s8 = scalar_lea.sflag [#allocation5], 1
    %9 = vsyncpa %s8, 0
    loop: start=0, step=1, limit=4
    $region2: #{tpu_custom_call.1} parent=1 // loop_pre_header
      _
    $region3: #{tpu_custom_call.1} parent=1 // loop_header
      %s11 = sphi 0, %s15
      %p12 = scmp.ge.s32.totalorder %s11, 4
      %s18 = sphi 0, %s30
      %s19 = sphi 0, %s26
      %s20 = sphi 0, %s18
      %s21 = sphi 0, %s19
      %s22 = sphi 0, %s20
      %s23 = sphi 0, %s21
      %s33 = sphi 0, %s35
      %s36 = sphi 0, %s33
      %s37 = sphi 0, %s36
      %s53 = sphi 0, %s37
      %s61 = sphi 0, %s63
      %s64 = sphi 0, %s61
      %s65 = sphi 0, %s64
      %s81 = sphi 0, %s65
      %s87 = sphi 0, %s89
      %s90 = sphi 0, %s87
      %s91 = sphi 0, %s90
      %s107 = sphi 0, %s91
    $region4: #{tpu_custom_call.1} parent=1 // loop_header_branch
      %14 = sbr.rel (%p12) target = $region8
    $region5: #{tpu_custom_call.1} parent=1 // loop_body
      %s16 = ssub.s32 %s11, 1
      %s17 = ssub.s32 %s11, 2
      %s24 = sadd.s32 1, %s19
      %p25 = scmp.ge.s32.totalorder %s24, 1
      %s26 = scalar_select %p25, 0, %s24
      %s27 = sadd.s32 1, %s18
      %s28 = scalar_select %p25, %s27, %s18
      %p29 = scmp.ge.s32.totalorder %s28, 2
      %s30 = scalar_select %p29, 0, %s28
      %s31 = ssub.s32 %s18, %s30
      %p32 = scmp.eq.s32.totalorder %s31, 0
      %s34 = sadd.s32 %s33, 1
      %s35 = scalar_select %p32, %s33, %s34
      %p38 = pneg %p32
      %p39 = scmp.eq.s32.totalorder %s11, 1
      %p40 = por %p38, %p39
      %p41 = scmp.ne.s32.totalorder %s33, %s36
      %p42 = scmp.eq.s32.totalorder %s11, 0
      %p43 = por %p41, %p42
      %p44 = scmp.ne.s32.totalorder %s33, %s36
      %p45 = scmp.eq.s32.totalorder %s16, 1
      %p46 = por %p44, %p45
      %p47 = scmp.ne.s32.totalorder %s36, %s37
      %p48 = scmp.eq.s32.totalorder %s16, 0
      %p49 = por %p47, %p48
      %p50 = scmp.ne.s32.totalorder %s36, %s37
      %p51 = scmp.eq.s32.totalorder %s17, 1
      %p52 = por %p50, %p51
      %p54 = scmp.ne.s32.totalorder %s37, %s53
      %p55 = scmp.eq.s32.totalorder %s17, 0
      %p56 = por %p54, %p55
      %s57 = ssub.s32 %s18, %s30
      %s58 = ssub.s32 %s19, %s26
      %s59 = sor.u32 %s57, %s58
      %p60 = scmp.eq.s32.totalorder %s59, 0
      %s62 = sadd.s32 %s61, 1
      %s63 = scalar_select %p60, %s61, %s62
      %p66 = pneg %p60
      %p67 = scmp.eq.s32.totalorder %s11, 1
      %p68 = por %p66, %p67
      %p69 = scmp.ne.s32.totalorder %s61, %s64
      %p70 = scmp.eq.s32.totalorder %s11, 0
      %p71 = por %p69, %p70
      %p72 = scmp.ne.s32.totalorder %s61, %s64
      %p73 = scmp.eq.s32.totalorder %s16, 1
      %p74 = por %p72, %p73
      %p75 = scmp.ne.s32.totalorder %s64, %s65
      %p76 = scmp.eq.s32.totalorder %s16, 0
      %p77 = por %p75, %p76
      %p78 = scmp.ne.s32.totalorder %s64, %s65
      %p79 = scmp.eq.s32.totalorder %s17, 1
      %p80 = por %p78, %p79
      %p82 = scmp.ne.s32.totalorder %s65, %s81
      %p83 = scmp.eq.s32.totalorder %s17, 0
      %p84 = por %p82, %p83
      %s85 = ssub.s32 %s18, %s30
      %p86 = scmp.eq.s32.totalorder %s85, 0
      %s88 = sadd.s32 %s87, 1
      %s89 = scalar_select %p86, %s87, %s88
      %p92 = pneg %p86
      %p93 = scmp.eq.s32.totalorder %s11, 1
      %p94 = por %p92, %p93
      %p95 = scmp.ne.s32.totalorder %s87, %s90
      %p96 = scmp.eq.s32.totalorder %s11, 0
      %p97 = por %p95, %p96
      %p98 = scmp.ne.s32.totalorder %s87, %s90
      %p99 = scmp.eq.s32.totalorder %s16, 1
      %p100 = por %p98, %p99
      %p101 = scmp.ne.s32.totalorder %s90, %s91
      %p102 = scmp.eq.s32.totalorder %s16, 0
      %p103 = por %p101, %p102
      %p104 = scmp.ne.s32.totalorder %s90, %s91
      %p105 = scmp.eq.s32.totalorder %s17, 1
      %p106 = por %p104, %p105
      %p108 = scmp.ne.s32.totalorder %s91, %s107
      %p109 = scmp.eq.s32.totalorder %s17, 0
      %p110 = por %p108, %p109
      %p111 = scmp.le.s32.totalorder 1, %s11
      %p112 = scmp.lt.s32.totalorder %s11, 3
      %p113 = pnand %p111, %p112
      %p114 = pneg %p113
      // Predicated region
      $region9: #{tpu_custom_call.1} parent=5 // pred_check
        _
      $region10: #{tpu_custom_call.1} parent=5 // pred_check_branch
        %116 = sbr.rel (%p113) target = $region12
      $region11: #{tpu_custom_call.1} parent=5 // pred_region
        %s117 = ssub.s32 %s11, 1
      $region12: #{tpu_custom_call.1} parent=5 // pred_fallthru
        _
      %p118 = scmp.lt.s32.totalorder %s11, 2
      // Predicated region
      $region13: #{tpu_custom_call.1} parent=5 // pred_check
        %p119 = pneg %p118
      $region14: #{tpu_custom_call.1} parent=5 // pred_check_branch
        %121 = sbr.rel (%p119) target = $region16
      $region15: #{tpu_custom_call.1} parent=5 // pred_region
        // Predicated region
        $region17: #{tpu_custom_call.1} parent=15 // pred_check
          %p122 = pneg %p43
        $region18: #{tpu_custom_call.1} parent=15 // pred_check_branch
          %124 = sbr.rel (%p122) target = $region20
        $region19: #{tpu_custom_call.1} parent=15 // pred_region
          %s125 = smul.u32 4, %s18
          %p126 = scmp.lt.s32.totalorder %s125, 7
          %s127 = scalar_select %p126, %s125, 7
          %s128 = smul.addr %s127, 8
          %s129 = scalar_lea.vmem %s0, %s128
          %s130 = smul.u32 4, %s18
        $region20: #{tpu_custom_call.1} parent=15 // pred_fallthru
          _
        // Predicated region
        $region21: #{tpu_custom_call.1} parent=15 // pred_check
          %p131 = pneg %p71
        $region22: #{tpu_custom_call.1} parent=15 // pred_check_branch
          %133 = sbr.rel (%p131) target = $region24
        $region23: #{tpu_custom_call.1} parent=15 // pred_region
          %s134 = sand.u32 %s61, 1
          %s135 = scalar_lea.sflag [#allocation5], %s134
          %s136 = sand.u32 %s61, 1
          %s137 = smul.addr %s136, 256
          %s138 = scalar_lea.vmem [#allocation4], %s137
          %s139 = smul.u32 4, %s18
          %s140 = smul.u32 8, %s19
          %s142 = ssub.s32 4096, 4096
          %143 = vsyncadd %s135, %s142
          %s144 = smul.addr %s139, 8
          %s145 = sadd.s32 %s140, %s144
          %s146 = smul.addr %s145, 128
          %s147 = scalar_lea.hbm %s1, %s146
          %s148 = sshll.u32 %s138, 4
          %s149 = int_to_ptr.vmem [resolvable:$true] %s148
          %154 = dma.hbm_to_vmem [thread:$0]  %s147, 4096, %s149, %s135, 1024, 1024, 64
        $region24: #{tpu_custom_call.1} parent=15 // pred_fallthru
          _
      $region16: #{tpu_custom_call.1} parent=5 // pred_fallthru
        _
      %p155 = scmp.le.s32.totalorder 1, %s11
      %p156 = scmp.lt.s32.totalorder %s11, 3
      %p157 = pnand %p155, %p156
      %p158 = pneg %p157
      // Predicated region
      $region25: #{tpu_custom_call.1} parent=5 // pred_check
        _
      $region26: #{tpu_custom_call.1} parent=5 // pred_check_branch
        %160 = sbr.rel (%p157) target = $region28
      $region27: #{tpu_custom_call.1} parent=5 // pred_region
        %s161 = ssub.s32 %s11, 1
        %s162 = sand.u32 %s64, 1
        %s163 = scalar_lea.sflag [#allocation5], %s162
        %s164 = sand.u32 %s64, 1
        %s165 = smul.addr %s164, 256
        %s166 = scalar_lea.vmem [#allocation4], %s165
        // Predicated region
        $region29: #{tpu_custom_call.1} parent=27 // pred_check
          %p167 = pneg %p77
        $region30: #{tpu_custom_call.1} parent=27 // pred_check_branch
          %169 = sbr.rel (%p167) target = $region32
        $region31: #{tpu_custom_call.1} parent=27 // pred_region
          %170 = dma.done %s163, 4096
        $region32: #{tpu_custom_call.1} parent=27 // pred_fallthru
          _
        %s171 = smul.u32 4, %s20
        %p172 = scmp.lt.s32.totalorder %s171, 7
        %s173 = scalar_select %p172, %s171, 7
        %s174 = smul.addr %s173, 8
        %s175 = scalar_lea.vmem %s0, %s174
        %p176 = pneg %p49
        %p177 = pneg %p46
        %s178 = sand.u32 %s64, 1
        %s179 = scalar_lea.sflag [#allocation5], %s178
        %s180 = sand.u32 %s64, 1
        %s181 = smul.addr %s180, 256
        %s182 = scalar_lea.vmem [#allocation4], %s181
        %p183 = pneg %p77
        %p184 = pneg %p74
        %p185 = pneg %p103
        %p186 = pneg %p100
        %s187 = smul.u32 4, %s20
        %p188 = scmp.lt.s32.totalorder %s187, 7
        %s189 = scalar_select %p188, %s187, 7
        %s190 = smul.addr %s189, 8
        %s191 = scalar_lea.vmem %s2, %s190
        %s192 = smul.u32 4, %s20
        %p193 = scmp.lt.s32.totalorder %s192, 7
        %s194 = scalar_select %p193, %s192, 7
        %s195 = smul.addr %s194, 8
        %s196 = scalar_lea.vmem %s0, %s195
        %s197 = smul.u32 4, %s20
        %s198 = smul.u32 4, %s20
        %s199 = smul.u32 8, %s21
        %s200 = smul.u32 4, %s20
        %p201 = scmp.lt.s32.totalorder %s200, 7
        %s202 = scalar_select %p201, %s200, 7
        %s203 = smul.addr %s202, 8
        %s204 = scalar_lea.vmem %s2, %s203
        %s205 = smul.u32 4, %s20
        %p206 = scmp.eq.s32.totalorder %s21, 0
        // Predicated region
        $region33: #{tpu_custom_call.1} parent=27 // pred_check
          %p207 = pneg %p206
        $region34: #{tpu_custom_call.1} parent=27 // pred_check_branch
          %209 = sbr.rel (%p207) target = $region36
        $region35: #{tpu_custom_call.1} parent=27 // pred_region
          %vm210 = vcmask 7168
          %211 = vst.msk [vmem:[#allocation2] sm:$0xff] %vm210, -inf
          %212 = vst.msk [vmem:[#allocation2 + $0x8] sm:$0xff] %vm210, -inf
          %213 = vst.msk [vmem:[#allocation2 + $0x10] sm:$0xff] %vm210, -inf
          %214 = vst.msk [vmem:[#allocation2 + $0x18] sm:$0xff] %vm210, -inf
          %215 = vst.msk [vmem:[#allocation3] sm:$0xff] %vm210, 0.0
          %216 = vst.msk [vmem:[#allocation3 + $0x8] sm:$0xff] %vm210, 0.0
          %217 = vst.msk [vmem:[#allocation3 + $0x10] sm:$0xff] %vm210, 0.0
          %218 = vst.msk [vmem:[#allocation3 + $0x18] sm:$0xff] %vm210, 0.0
        $region36: #{tpu_custom_call.1} parent=27 // pred_fallthru
          _
        %v219 = vld [vmem:[%s166] sm:$0xff]
        %v220 = vld [vmem:[%s166 + $0x8] sm:$0xff]
        %v221 = vld [vmem:[%s166 + $0x10] sm:$0xff]
        %v222 = vld [vmem:[%s166 + $0x18] sm:$0xff]
        %v223 = vld [vmem:[%s166 + $0x20] sm:$0xff]
        %v224 = vld [vmem:[%s166 + $0x28] sm:$0xff]
        %v225 = vld [vmem:[%s166 + $0x30] sm:$0xff]
        %v226 = vld [vmem:[%s166 + $0x38] sm:$0xff]
        %v227 = vld [vmem:[%s166 + $0x40] sm:$0xff]
        %v228 = vld [vmem:[%s166 + $0x48] sm:$0xff]
        %v229 = vld [vmem:[%s166 + $0x50] sm:$0xff]
        %v230 = vld [vmem:[%s166 + $0x58] sm:$0xff]
        %v231 = vld [vmem:[%s166 + $0x60] sm:$0xff]
        %v232 = vld [vmem:[%s166 + $0x68] sm:$0xff]
        %v233 = vld [vmem:[%s166 + $0x70] sm:$0xff]
        %v234 = vld [vmem:[%s166 + $0x78] sm:$0xff]
        %v235 = vld [vmem:[%s166 + $0x80] sm:$0xff]
        %v236 = vld [vmem:[%s166 + $0x88] sm:$0xff]
        %v237 = vld [vmem:[%s166 + $0x90] sm:$0xff]
        %v238 = vld [vmem:[%s166 + $0x98] sm:$0xff]
        %v239 = vld [vmem:[%s166 + $0xa0] sm:$0xff]
        %v240 = vld [vmem:[%s166 + $0xa8] sm:$0xff]
        %v241 = vld [vmem:[%s166 + $0xb0] sm:$0xff]
        %v242 = vld [vmem:[%s166 + $0xb8] sm:$0xff]
        %v243 = vld [vmem:[%s166 + $0xc0] sm:$0xff]
        %v244 = vld [vmem:[%s166 + $0xc8] sm:$0xff]
        %v245 = vld [vmem:[%s166 + $0xd0] sm:$0xff]
        %v246 = vld [vmem:[%s166 + $0xd8] sm:$0xff]
        %v247 = vld [vmem:[%s166 + $0xe0] sm:$0xff]
        %v248 = vld [vmem:[%s166 + $0xe8] sm:$0xff]
        %v249 = vld [vmem:[%s166 + $0xf0] sm:$0xff]
        %v250 = vld [vmem:[%s166 + $0xf8] sm:$0xff]
        %s251 = smul.u32 %s21, 1024
        %s252 = ssub.s32 1000, %s251
        %v253 = vlaneseq
        %v254 = vand.u32 %v253, 127
        %v255 = vadd.s32 %v254, 128
        %v256 = vadd.s32 %v254, 256
        %v257 = vadd.s32 %v254, 384
        %v258 = vadd.s32 %v254, 512
        %v259 = vadd.s32 %v254, 640
        %v260 = vadd.s32 %v254, 768
        %v261 = vadd.s32 %v254, 896
        %v262 = vstv %s252
        %vm263 = vcmp.lt.s32.totalorder %v254, %v262
        %vm264 = vcmp.lt.s32.totalorder %v255, %v262
        %vm265 = vcmp.lt.s32.totalorder %v256, %v262
        %vm266 = vcmp.lt.s32.totalorder %v257, %v262
        %vm267 = vcmp.lt.s32.totalorder %v258, %v262
        %vm268 = vcmp.lt.s32.totalorder %v259, %v262
        %vm269 = vcmp.lt.s32.totalorder %v260, %v262
        %vm270 = vcmp.lt.s32.totalorder %v261, %v262
        %v271 = vsel %vm263, %v219, -inf
        %v272 = vsel %vm264, %v220, -inf
        %v273 = vsel %vm265, %v221, -inf
        %v274 = vsel %vm266, %v222, -inf
        %v275 = vsel %vm267, %v223, -inf
        %v276 = vsel %vm268, %v224, -inf
        %v277 = vsel %vm269, %v225, -inf
        %v278 = vsel %vm270, %v226, -inf
        %v279 = vsel %vm263, %v227, -inf
        %v280 = vsel %vm264, %v228, -inf
        %v281 = vsel %vm265, %v229, -inf
        %v282 = vsel %vm266, %v230, -inf
        %v283 = vsel %vm267, %v231, -inf
        %v284 = vsel %vm268, %v232, -inf
        %v285 = vsel %vm269, %v233, -inf
        %v286 = vsel %vm270, %v234, -inf
        %v287 = vsel %vm263, %v235, -inf
        %v288 = vsel %vm264, %v236, -inf
        %v289 = vsel %vm265, %v237, -inf
        %v290 = vsel %vm266, %v238, -inf
        %v291 = vsel %vm267, %v239, -inf
        %v292 = vsel %vm268, %v240, -inf
        %v293 = vsel %vm269, %v241, -inf
        %v294 = vsel %vm270, %v242, -inf
        %v295 = vsel %vm263, %v243, -inf
        %v296 = vsel %vm264, %v244, -inf
        %v297 = vsel %vm265, %v245, -inf
        %v298 = vsel %vm266, %v246, -inf
        %v299 = vsel %vm267, %v247, -inf
        %v300 = vsel %vm268, %v248, -inf
        %v301 = vsel %vm269, %v249, -inf
        %v302 = vsel %vm270, %v250, -inf
        %v303 = vld [vmem:[#allocation2] sm:$0xff]
        %v304 = vld [vmem:[#allocation2 + $0x8] sm:$0xff]
        %v305 = vld [vmem:[#allocation2 + $0x10] sm:$0xff]
        %v306 = vld [vmem:[#allocation2 + $0x18] sm:$0xff]
        %v307 = vmax.f32 %v271, %v272
        %v308 = vmax.f32 %v307, %v273
        %v309 = vmax.f32 %v308, %v274
        %v310 = vmax.f32 %v309, %v275
        %v311 = vmax.f32 %v310, %v276
        %v312 = vmax.f32 %v311, %v277
        %v313 = vmax.f32 %v312, %v278
        %314 = vmax.xlane.f32.xlu0 %v313
        %v315 = vpop.xlane.xlu0 %314
        %v316 = vmax.f32 %v279, %v280
        %v317 = vmax.f32 %v316, %v281
        %v318 = vmax.f32 %v317, %v282
        %v319 = vmax.f32 %v318, %v283
        %v320 = vmax.f32 %v319, %v284
        %v321 = vmax.f32 %v320, %v285
        %v322 = vmax.f32 %v321, %v286
        %323 = vmax.xlane.f32.xlu0 %v322
        %v324 = vpop.xlane.xlu0 %323
        %v325 = vmax.f32 %v287, %v288
        %v326 = vmax.f32 %v325, %v289
        %v327 = vmax.f32 %v326, %v290
        %v328 = vmax.f32 %v327, %v291
        %v329 = vmax.f32 %v328, %v292
        %v330 = vmax.f32 %v329, %v293
        %v331 = vmax.f32 %v330, %v294
        %332 = vmax.xlane.f32.xlu0 %v331
        %v333 = vpop.xlane.xlu0 %332
        %v334 = vmax.f32 %v295, %v296
        %v335 = vmax.f32 %v334, %v297
        %v336 = vmax.f32 %v335, %v298
        %v337 = vmax.f32 %v336, %v299
        %v338 = vmax.f32 %v337, %v300
        %v339 = vmax.f32 %v338, %v301
        %v340 = vmax.f32 %v339, %v302
        %341 = vmax.xlane.f32.xlu0 %v340
        %v342 = vpop.xlane.xlu0 %341
        %v343 = vmax.f32 %v303, %v315
        %v344 = vmax.f32 %v304, %v324
        %v345 = vmax.f32 %v305, %v333
        %v346 = vmax.f32 %v306, %v342
        %v347 = vsub.f32 %v303, %v343
        %v348 = vsub.f32 %v304, %v344
        %v349 = vsub.f32 %v305, %v345
        %v350 = vsub.f32 %v306, %v346
        %v351 = vmul.f32 %v347, 1.442695
        %v352 = vpow.pop %v351
        %v353 = vmul.f32 %v348, 1.442695
        %v354 = vpow.pop %v353
        %v355 = vmul.f32 %v349, 1.442695
        %v356 = vpow.pop %v355
        %v357 = vmul.f32 %v350, 1.442695
        %v358 = vpow.pop %v357
        %v359 = vld [vmem:[#allocation3] sm:$0xff]
        %v360 = vld [vmem:[#allocation3 + $0x8] sm:$0xff]
        %v361 = vld [vmem:[#allocation3 + $0x10] sm:$0xff]
        %v362 = vld [vmem:[#allocation3 + $0x18] sm:$0xff]
        %v363 = vmul.f32 %v352, %v359
        %v364 = vmul.f32 %v354, %v360
        %v365 = vmul.f32 %v356, %v361
        %v366 = vmul.f32 %v358, %v362
        %368 = vset.pattern.permute.xlu0 0
        %369 = vperm.xlu0 %368, %v343
        %v370 = vpop.permute.xlu0 %369
        %373 = vset.pattern.permute.xlu0 0
        %374 = vperm.xlu0 %373, %v344
        %v375 = vpop.permute.xlu0 %374
        %378 = vset.pattern.permute.xlu0 0
        %379 = vperm.xlu0 %378, %v345
        %v380 = vpop.permute.xlu0 %379
        %383 = vset.pattern.permute.xlu0 0
        %384 = vperm.xlu0 %383, %v346
        %v385 = vpop.permute.xlu0 %384
        %v387 = vsub.f32 %v271, %v370
        %v388 = vsub.f32 %v272, %v370
        %v389 = vsub.f32 %v273, %v370
        %v390 = vsub.f32 %v274, %v370
        %v391 = vsub.f32 %v275, %v370
        %v392 = vsub.f32 %v276, %v370
        %v393 = vsub.f32 %v277, %v370
        %v394 = vsub.f32 %v278, %v370
        %v395 = vsub.f32 %v279, %v375
        %v396 = vsub.f32 %v280, %v375
        %v397 = vsub.f32 %v281, %v375
        %v398 = vsub.f32 %v282, %v375
        %v399 = vsub.f32 %v283, %v375
        %v400 = vsub.f32 %v284, %v375
        %v401 = vsub.f32 %v285, %v375
        %v402 = vsub.f32 %v286, %v375
        %v403 = vsub.f32 %v287, %v380
        %v404 = vsub.f32 %v288, %v380
        %v405 = vsub.f32 %v289, %v380
        %v406 = vsub.f32 %v290, %v380
        %v407 = vsub.f32 %v291, %v380
        %v408 = vsub.f32 %v292, %v380
        %v409 = vsub.f32 %v293, %v380
        %v410 = vsub.f32 %v294, %v380
        %v411 = vsub.f32 %v295, %v385
        %v412 = vsub.f32 %v296, %v385
        %v413 = vsub.f32 %v297, %v385
        %v414 = vsub.f32 %v298, %v385
        %v415 = vsub.f32 %v299, %v385
        %v416 = vsub.f32 %v300, %v385
        %v417 = vsub.f32 %v301, %v385
        %v418 = vsub.f32 %v302, %v385
        %v419 = vmul.f32 %v387, 1.442695
        %v420 = vpow.pop %v419
        %v421 = vmul.f32 %v388, 1.442695
        %v422 = vpow.pop %v421
        %v423 = vmul.f32 %v389, 1.442695
        %v424 = vpow.pop %v423
        %v425 = vmul.f32 %v390, 1.442695
        %v426 = vpow.pop %v425
        %v427 = vmul.f32 %v391, 1.442695
        %v428 = vpow.pop %v427
        %v429 = vmul.f32 %v392, 1.442695
        %v430 = vpow.pop %v429
        %v431 = vmul.f32 %v393, 1.442695
        %v432 = vpow.pop %v431
        %v433 = vmul.f32 %v394, 1.442695
        %v434 = vpow.pop %v433
        %v435 = vmul.f32 %v395, 1.442695
        %v436 = vpow.pop %v435
        %v437 = vmul.f32 %v396, 1.442695
        %v438 = vpow.pop %v437
        %v439 = vmul.f32 %v397, 1.442695
        %v440 = vpow.pop %v439
        %v441 = vmul.f32 %v398, 1.442695
        %v442 = vpow.pop %v441
        %v443 = vmul.f32 %v399, 1.442695
        %v444 = vpow.pop %v443
        %v445 = vmul.f32 %v400, 1.442695
        %v446 = vpow.pop %v445
        %v447 = vmul.f32 %v401, 1.442695
        %v448 = vpow.pop %v447
        %v449 = vmul.f32 %v402, 1.442695
        %v450 = vpow.pop %v449
        %v451 = vmul.f32 %v403, 1.442695
        %v452 = vpow.pop %v451
        %v453 = vmul.f32 %v404, 1.442695
        %v454 = vpow.pop %v453
        %v455 = vmul.f32 %v405, 1.442695
        %v456 = vpow.pop %v455
        %v457 = vmul.f32 %v406, 1.442695
        %v458 = vpow.pop %v457
        %v459 = vmul.f32 %v407, 1.442695
        %v460 = vpow.pop %v459
        %v461 = vmul.f32 %v408, 1.442695
        %v462 = vpow.pop %v461
        %v463 = vmul.f32 %v409, 1.442695
        %v464 = vpow.pop %v463
        %v465 = vmul.f32 %v410, 1.442695
        %v466 = vpow.pop %v465
        %v467 = vmul.f32 %v411, 1.442695
        %v468 = vpow.pop %v467
        %v469 = vmul.f32 %v412, 1.442695
        %v470 = vpow.pop %v469
        %v471 = vmul.f32 %v413, 1.442695
        %v472 = vpow.pop %v471
        %v473 = vmul.f32 %v414, 1.442695
        %v474 = vpow.pop %v473
        %v475 = vmul.f32 %v415, 1.442695
        %v476 = vpow.pop %v475
        %v477 = vmul.f32 %v416, 1.442695
        %v478 = vpow.pop %v477
        %v479 = vmul.f32 %v417, 1.442695
        %v480 = vpow.pop %v479
        %v481 = vmul.f32 %v418, 1.442695
        %v482 = vpow.pop %v481
        %v483 = vadd.f32 %v420, %v422
        %v484 = vadd.f32 %v483, %v424
        %v485 = vadd.f32 %v484, %v426
        %v486 = vadd.f32 %v485, %v428
        %v487 = vadd.f32 %v486, %v430
        %v488 = vadd.f32 %v487, %v432
        %v489 = vadd.f32 %v488, %v434
        %490 = vadd.xlane.f32.xlu0 %v489
        %v491 = vpop.xlane.xlu0 %490
        %v492 = vadd.f32 %v436, %v438
        %v493 = vadd.f32 %v492, %v440
        %v494 = vadd.f32 %v493, %v442
        %v495 = vadd.f32 %v494, %v444
        %v496 = vadd.f32 %v495, %v446
        %v497 = vadd.f32 %v496, %v448
        %v498 = vadd.f32 %v497, %v450
        %499 = vadd.xlane.f32.xlu0 %v498
        %v500 = vpop.xlane.xlu0 %499
        %v501 = vadd.f32 %v452, %v454
        %v502 = vadd.f32 %v501, %v456
        %v503 = vadd.f32 %v502, %v458
        %v504 = vadd.f32 %v503, %v460
        %v505 = vadd.f32 %v504, %v462
        %v506 = vadd.f32 %v505, %v464
        %v507 = vadd.f32 %v506, %v466
        %508 = vadd.xlane.f32.xlu0 %v507
        %v509 = vpop.xlane.xlu0 %508
        %v510 = vadd.f32 %v468, %v470
        %v511 = vadd.f32 %v510, %v472
        %v512 = vadd.f32 %v511, %v474
        %v513 = vadd.f32 %v512, %v476
        %v514 = vadd.f32 %v513, %v478
        %v515 = vadd.f32 %v514, %v480
        %v516 = vadd.f32 %v515, %v482
        %517 = vadd.xlane.f32.xlu0 %v516
        %v518 = vpop.xlane.xlu0 %517
        %v519 = vadd.f32 %v363, %v491
        %v520 = vadd.f32 %v364, %v500
        %v521 = vadd.f32 %v365, %v509
        %v522 = vadd.f32 %v366, %v518
        %vm523 = vcmask 7168
        %524 = vst.msk [vmem:[#allocation3] sm:$0xff] %vm523, %v519
        %525 = vst.msk [vmem:[#allocation3 + $0x8] sm:$0xff] %vm523, %v520
        %526 = vst.msk [vmem:[#allocation3 + $0x10] sm:$0xff] %vm523, %v521
        %527 = vst.msk [vmem:[#allocation3 + $0x18] sm:$0xff] %vm523, %v522
        %528 = vst.msk [vmem:[#allocation2] sm:$0xff] %vm523, %v343
        %529 = vst.msk [vmem:[#allocation2 + $0x8] sm:$0xff] %vm523, %v344
        %530 = vst.msk [vmem:[#allocation2 + $0x10] sm:$0xff] %vm523, %v345
        %531 = vst.msk [vmem:[#allocation2 + $0x18] sm:$0xff] %vm523, %v346
        // Predicated region
        $region37: #{tpu_custom_call.1} parent=27 // pred_check
          %p532 = pneg %p206
        $region38: #{tpu_custom_call.1} parent=27 // pred_check_branch
          %534 = sbr.rel (%p532) target = $region40
        $region39: #{tpu_custom_call.1} parent=27 // pred_region
          %v535 = vld [vmem:[#allocation2] sm:$0xff]
          %v536 = vld [vmem:[#allocation2 + $0x8] sm:$0xff]
          %v537 = vld [vmem:[#allocation2 + $0x10] sm:$0xff]
          %v538 = vld [vmem:[#allocation2 + $0x18] sm:$0xff]
          %v539 = vld [vmem:[#allocation3] sm:$0xff]
          %v540 = vld [vmem:[#allocation3 + $0x8] sm:$0xff]
          %v541 = vld [vmem:[#allocation3 + $0x10] sm:$0xff]
          %v542 = vld [vmem:[#allocation3 + $0x18] sm:$0xff]
          %v543 = vlog2.pop %v539
          %v544 = vmul.f32 %v543, 0.6931472
          %v545 = vlog2.pop %v540
          %v546 = vmul.f32 %v545, 0.6931472
          %v547 = vlog2.pop %v541
          %v548 = vmul.f32 %v547, 0.6931472
          %v549 = vlog2.pop %v542
          %v550 = vmul.f32 %v549, 0.6931472
          %v551 = vadd.f32 %v535, %v544
          %v552 = vadd.f32 %v536, %v546
          %v553 = vadd.f32 %v537, %v548
          %v554 = vadd.f32 %v538, %v550
          %v555 = vld [vmem:[%s196] sm:$0xff]
          %v556 = vld [vmem:[%s196 + $0x8] sm:$0xff]
          %v557 = vld [vmem:[%s196 + $0x10] sm:$0xff]
          %v558 = vld [vmem:[%s196 + $0x18] sm:$0xff]
          %v559 = vsub.f32 %v551, %v555
          %v560 = vsub.f32 %v552, %v556
          %v561 = vsub.f32 %v553, %v557
          %v562 = vsub.f32 %v554, %v558
          %563 = vst.msk [vmem:[%s204] sm:$0xff] %vm523, %v559
          %564 = vst.msk [vmem:[%s204 + $0x8] sm:$0xff] %vm523, %v560
          %565 = vst.msk [vmem:[%s204 + $0x10] sm:$0xff] %vm523, %v561
          %566 = vst.msk [vmem:[%s204 + $0x18] sm:$0xff] %vm523, %v562
        $region40: #{tpu_custom_call.1} parent=27 // pred_fallthru
          _
        %s567 = smul.u32 4, %s20
        %p568 = scmp.lt.s32.totalorder %s567, 7
        %s569 = scalar_select %p568, %s567, 7
        %s570 = smul.addr %s569, 8
        %s571 = scalar_lea.vmem %s2, %s570
        // Predicated region
        $region41: #{tpu_custom_call.1} parent=27 // pred_check
          %p572 = pneg %p100
        $region42: #{tpu_custom_call.1} parent=27 // pred_check_branch
          %574 = sbr.rel (%p572) target = $region44
        $region43: #{tpu_custom_call.1} parent=27 // pred_region
          %s575 = smul.u32 4, %s20
        $region44: #{tpu_custom_call.1} parent=27 // pred_fallthru
          _
      $region28: #{tpu_custom_call.1} parent=5 // pred_fallthru
        _
      %p576 = scmp.le.s32.totalorder 2, %s11
      // Predicated region
      $region45: #{tpu_custom_call.1} parent=5 // pred_check
        %p577 = pneg %p576
      $region46: #{tpu_custom_call.1} parent=5 // pred_check_branch
        %579 = sbr.rel (%p577) target = $region48
      $region47: #{tpu_custom_call.1} parent=5 // pred_region
        %s580 = ssub.s32 %s11, 2
        // Predicated region
        $region49: #{tpu_custom_call.1} parent=47 // pred_check
          %p581 = pneg %p106
        $region50: #{tpu_custom_call.1} parent=47 // pred_check_branch
          %583 = sbr.rel (%p581) target = $region52
        $region51: #{tpu_custom_call.1} parent=47 // pred_region
          %s584 = smul.u32 4, %s22
          %p585 = scmp.lt.s32.totalorder %s584, 7
          %s586 = scalar_select %p585, %s584, 7
          %s587 = smul.addr %s586, 8
          %s588 = scalar_lea.vmem %s2, %s587
        $region52: #{tpu_custom_call.1} parent=47 // pred_fallthru
          _
      $region48: #{tpu_custom_call.1} parent=5 // pred_fallthru
        _
    $region6: #{tpu_custom_call.1} parent=1 // loop_footer
      %s15 = sadd.s32 1, %s11
    $region7: #{tpu_custom_call.1} parent=1 // loop_footer_branch
      %10 = sbr.rel target = $region3
    $region8: #{tpu_custom_call.1} parent=1 // loop_exit
      _
    %589 = vsyncpa [#allocation5], 1
    %s590 = scalar_lea.sflag [#allocation5], 1
    %591 = vsyncpa %s590, 1

</llo_original>
